<compile_context>
chip_gen: v7x
topology: tpu7x:2x2x1
jax: 0.10.0
libtpu: 0.0.40
codegen_flags: <defaults>
</compile_context>

<pallas_src>
import functools

import numpy as np
import jax
import jax.numpy as jnp
from jax.experimental import pallas as pl
from jax.experimental.pallas import tpu as pltpu


# ----------------------------- host glue: bicubic matrices -----------------------------

def _cubic_filter(x, a=-0.5):
    x = np.abs(x)
    return np.where(
        x < 1.0, ((a + 2.0) * x - (a + 3.0)) * x * x + 1.0,
        np.where(x < 2.0, a * (((x - 5.0) * x + 8.0) * x - 4.0), 0.0),
    )


def _bicubic_resize_matrix(in_size, out_size):
    """Row-stochastic (out_size, in_size) matrix for 1-D bicubic (antialiased) resize."""
    scale = in_size / out_size
    if scale > 1.0:           # downscaling -> widen support (antialias)
        support, invscale = 2.0 * scale, 1.0 / scale
    else:
        support, invscale = 2.0, 1.0
    W = np.zeros((out_size, in_size), dtype=np.float64)
    for i in range(out_size):
        center = scale * (i + 0.5)
        xmin = max(int(center - support + 0.5), 0)
        xmax = min(int(center + support + 0.5), in_size)
        js = np.arange(xmin, xmax)
        w = _cubic_filter((js - center + 0.5) * invscale)
        W[i, xmin:xmax] = w / w.sum()
    return W.astype(np.float32)


def _build_resize_crop_weights(H, W, S):
    """Fused Resize(short side -> S, bicubic) + CenterCrop(S) as two matrices.

    Returns wh (S, H) acting on rows and ww (S, W) acting on columns, i.e.
    centercrop(resize(x)) == wh @ x @ ww.T
    """
    # torchvision Resize(int): shorter side -> S, longer side -> int(S * long / short).
    if H <= W:
        new_h, new_w = S, max(S, int(S * W / H))
    else:
        new_h, new_w = max(S, int(S * H / W)), S
    wh_full = _bicubic_resize_matrix(H, new_h)   # (new_h, H)
    ww_full = _bicubic_resize_matrix(W, new_w)   # (new_w, W)
    top = int(round((new_h - S) / 2.0))          # torchvision CenterCrop offsets
    left = int(round((new_w - S) / 2.0))
    return wh_full[top:top + S], ww_full[left:left + S]


def _round_up(x, m):
    return (x + m - 1) // m * m


def _choose_batch(nc, h, w, s_row, s_lane, in_bytes, budget_bytes, max_batch=32):
    """Slabs processed per grid step, sized against a VMEM budget (v7x-safe)."""
    weight_bytes = 2 * (s_row * h + w * s_lane) * in_bytes        # double-buffered constants
    per_slab = (2 * h * w * in_bytes                 # input block (double-buffered)
                + 2 * s_row * s_lane * 4             # output block (double-buffered, f32)
                + max(h, s_row) * s_lane * 4         # stage-1 f32 intermediate
                + max(h, s_row) * s_lane * in_bytes  # its compute-dtype copy
                + s_row * s_lane * 4)                # per-slab result tile
    avail = max(budget_bytes - weight_bytes, per_slab)
    return int(max(1, min(avail // per_slab, nc, max_batch)))


# ----------------------------- Pallas kernel -----------------------------

def _transform_kernel(mean_ref, istd_ref, x_ref, wh_ref, wwt_ref, o_ref, *,
                      batch, height, compute_dtype, w_first):
    """One block of `batch` (n, c) slabs per grid step: resize+crop via matmuls, normalize."""
    i = pl.program_id(0)
    B, H = batch, height

    # Hoist the SMEM scalar reads out of the per-slab loop.
    means = [mean_ref[i * B + b] for b in range(B)]
    istds = [istd_ref[i * B + b] for b in range(B)]

    wh = wh_ref[...]                                       # (s_row, H)   compute_dtype
    wwt = wwt_ref[...]                                     # (W, s_lane)  compute_dtype
    x = x_ref[...]                                         # (B, H, W)    compute_dtype

    if w_first:
        # Stage 1: contract W as one MXU-dense matmul with M = B*H (free merge of leading dims).
        t = jnp.dot(x.reshape(B * H, x.shape[-1]), wwt,
                    preferred_element_type=jnp.float32)              # (B*H, s_lane)
        t = t.astype(compute_dtype)
        # Stage 2: per-slab vertical resize + normalize (B is static -> unrolled).
        for b in range(B):
            r = jnp.dot(wh, t[b * H:(b + 1) * H, :],
                        preferred_element_type=jnp.float32)          # (s_row, s_lane)
            o_ref[b] = ((r - means[b]) * istds[b]).astype(o_ref.dtype)
    else:
        # H > W: contracting H first costs fewer second-stage FLOPs.
        for b in range(B):
            t = jnp.dot(wh, x[b], preferred_element_type=jnp.float32)        # (s_row, W)
            r = jnp.dot(t.astype(compute_dtype), wwt,
                        preferred_element_type=jnp.float32)                  # (s_row, s_lane)
            o_ref[b] = ((r - means[b]) * istds[b]).astype(o_ref.dtype)


# ----------------------------- wrapper -----------------------------

def batch_image_transform(x, image_size, mean, std, *,
                          compute_dtype=jnp.bfloat16,
                          out_dtype=jnp.float32,
                          vmem_budget_bytes=24 * 1024 * 1024):
    """x: (N, C, H, W).  Returns (N, C, image_size, image_size) in `out_dtype` (eval path)."""
    N, C, H, W = x.shape
    S = int(image_size)
    NC = N * C

    wh_c, ww_c = _build_resize_crop_weights(H, W, S)       # (S, H), (S, W)

    # Lane-dense output: pad output cols up to a multiple of 128, rows to a multiple of 8.
    s_row = _round_up(S, 8)
    s_lane = _round_up(S, 128)
    wh = np.zeros((s_row, H), np.float32)
    wh[:S] = wh_c
    wwt = np.zeros((W, s_lane), np.float32)
    wwt[:, :S] = ww_c.T

    in_bytes = np.dtype(compute_dtype).itemsize
    B = _choose_batch(NC, H, W, s_row, s_lane, in_bytes, vmem_budget_bytes)
    NC_pad = _round_up(NC, B)
    grid = NC_pad // B

    x_flat = x.reshape(NC, H, W).astype(compute_dtype)      # bf16 in HBM: half the DMA bytes
    mean_flat = jnp.tile(jnp.asarray(mean, jnp.float32), N)             # (NC,)
    istd_flat = jnp.tile(1.0 / jnp.asarray(std, jnp.float32), N)        # (NC,)
    if NC_pad != NC:
        pad = NC_pad - NC
        x_flat = jnp.pad(x_flat, ((0, pad), (0, 0), (0, 0)))
        mean_flat = jnp.pad(mean_flat, (0, pad))
        istd_flat = jnp.pad(istd_flat, (0, pad), constant_values=1.0)

    wh_j = jnp.asarray(wh).astype(compute_dtype)
    wwt_j = jnp.asarray(wwt).astype(compute_dtype)

    kernel = functools.partial(
        _transform_kernel, batch=B, height=H, compute_dtype=compute_dtype,
        w_first=(W >= H))                                  # contract the longer axis first

    out = pl.pallas_call(
        kernel,
        out_shape=jax.ShapeDtypeStruct((NC_pad, s_row, s_lane), out_dtype),
        grid_spec=pltpu.PrefetchScalarGridSpec(
            num_scalar_prefetch=2,                          # mean_flat, istd_flat -> SMEM
            grid=(grid,),
            in_specs=[
                pl.BlockSpec((B, H, W), lambda i, m, s: (i, 0, 0)),      # images
                pl.BlockSpec((s_row, H), lambda i, m, s: (0, 0)),        # wh  (constant)
                pl.BlockSpec((W, s_lane), lambda i, m, s: (0, 0)),       # ww^T (constant)
            ],
            out_specs=pl.BlockSpec((B, s_row, s_lane), lambda i, m, s: (i, 0, 0)),
        ),
        compiler_params=pltpu.CompilerParams(
            dimension_semantics=("parallel",),              # no carried state -> v7x 2-TC split
            vmem_limit_bytes=32 * 1024 * 1024),
    )(mean_flat, istd_flat, x_flat, wh_j, wwt_j)

    return out[:NC, :S, :S].reshape(N, C, S, S)


# ----------------------------- demo -----------------------------

if __name__ == "__main__":
    key = jax.random.PRNGKey(0)
    N, C, H, W = 2, 3, 16, 24
    image_size = 8
    mean = (0.48145466, 0.4578275, 0.40821073)
    std = (0.26862954, 0.26130258, 0.27577711)

    x = jax.random.uniform(key, (N, C, H, W), dtype=jnp.float32)

    out = batch_image_transform(x, image_size, mean, std)
    jax.block_until_ready(out)

    assert out.shape == (N, C, image_size, image_size)
    assert out.dtype == jnp.float32
    assert bool(jnp.all(jnp.isfinite(out)))

    # Reference with the same fused matrices (f64 numpy); loose tol for the bf16 compute path.
    wh_c, ww_c = _build_resize_crop_weights(H, W, image_size)
    ref = np.einsum('sh,nchw,dw->ncsd',
                    wh_c.astype(np.float64), np.asarray(x, np.float64),
                    ww_c.astype(np.float64))
    ref = (ref - np.asarray(mean)[None, :, None, None]) / np.asarray(std)[None, :, None, None]
    err = float(np.max(np.abs(np.asarray(out, np.float64) - ref)))
    assert err < 0.25, f"max abs err {err}"

    print("KERNEL_OK")
</pallas_src>

<mosaic_0001>
module attributes {stable_mosaic.version = 11 : i64} {
  func.func @_transform_kernel(%arg0: i32, %arg1: memref<6xf32, #tpu.memory_space<smem>>, %arg2: memref<6xf32, #tpu.memory_space<smem>>, %arg3: memref<6x16x24xbf16, #tpu.memory_space<vmem>>, %arg4: memref<8x16xbf16, #tpu.memory_space<vmem>>, %arg5: memref<24x128xbf16, #tpu.memory_space<vmem>>, %arg6: memref<6x8x128xf32, #tpu.memory_space<vmem>>) attributes {dimension_semantics = [#tpu.dimension_semantics<parallel>], iteration_bounds = array<i64: 1>, scalar_prefetch = 2 : i64, scratch_operands = 0 : i64, tpu.core_type = #tpu.core_type<tc>, window_params = [{transform_indices = @transform_0, window_bounds = array<i64: 6, 16, 24>}, {pipeline_mode = #tpu.pipeline_mode<synchronous>, transform_indices = @transform_1, window_bounds = array<i64: 8, 16>}, {pipeline_mode = #tpu.pipeline_mode<synchronous>, transform_indices = @transform_2, window_bounds = array<i64: 24, 128>}, {transform_indices = @transform_3, window_bounds = array<i64: 6, 8, 128>}]} {
    %c6_i32 = arith.constant 6 : i32
    %0 = arith.muli %arg0, %c6_i32 : i32
    %c0_i32 = arith.constant 0 : i32
    %1 = arith.addi %0, %c0_i32 : i32
    %2 = arith.index_cast %1 : i32 to index
    %3 = memref.load %arg1[%2] : memref<6xf32, #tpu.memory_space<smem>>
    %c6_i32_0 = arith.constant 6 : i32
    %4 = arith.muli %arg0, %c6_i32_0 : i32
    %c1_i32 = arith.constant 1 : i32
    %5 = arith.addi %4, %c1_i32 : i32
    %6 = arith.index_cast %5 : i32 to index
    %7 = memref.load %arg1[%6] : memref<6xf32, #tpu.memory_space<smem>>
    %c6_i32_1 = arith.constant 6 : i32
    %8 = arith.muli %arg0, %c6_i32_1 : i32
    %c2_i32 = arith.constant 2 : i32
    %9 = arith.addi %8, %c2_i32 : i32
    %10 = arith.index_cast %9 : i32 to index
    %11 = memref.load %arg1[%10] : memref<6xf32, #tpu.memory_space<smem>>
    %c6_i32_2 = arith.constant 6 : i32
    %12 = arith.muli %arg0, %c6_i32_2 : i32
    %c3_i32 = arith.constant 3 : i32
    %13 = arith.addi %12, %c3_i32 : i32
    %14 = arith.index_cast %13 : i32 to index
    %15 = memref.load %arg1[%14] : memref<6xf32, #tpu.memory_space<smem>>
    %c6_i32_3 = arith.constant 6 : i32
    %16 = arith.muli %arg0, %c6_i32_3 : i32
    %c4_i32 = arith.constant 4 : i32
    %17 = arith.addi %16, %c4_i32 : i32
    %18 = arith.index_cast %17 : i32 to index
    %19 = memref.load %arg1[%18] : memref<6xf32, #tpu.memory_space<smem>>
    %c6_i32_4 = arith.constant 6 : i32
    %20 = arith.muli %arg0, %c6_i32_4 : i32
    %c5_i32 = arith.constant 5 : i32
    %21 = arith.addi %20, %c5_i32 : i32
    %22 = arith.index_cast %21 : i32 to index
    %23 = memref.load %arg1[%22] : memref<6xf32, #tpu.memory_space<smem>>
    %c6_i32_5 = arith.constant 6 : i32
    %24 = arith.muli %arg0, %c6_i32_5 : i32
    %c0_i32_6 = arith.constant 0 : i32
    %25 = arith.addi %24, %c0_i32_6 : i32
    %26 = arith.index_cast %25 : i32 to index
    %27 = memref.load %arg2[%26] : memref<6xf32, #tpu.memory_space<smem>>
    %c6_i32_7 = arith.constant 6 : i32
    %28 = arith.muli %arg0, %c6_i32_7 : i32
    %c1_i32_8 = arith.constant 1 : i32
    %29 = arith.addi %28, %c1_i32_8 : i32
    %30 = arith.index_cast %29 : i32 to index
    %31 = memref.load %arg2[%30] : memref<6xf32, #tpu.memory_space<smem>>
    %c6_i32_9 = arith.constant 6 : i32
    %32 = arith.muli %arg0, %c6_i32_9 : i32
    %c2_i32_10 = arith.constant 2 : i32
    %33 = arith.addi %32, %c2_i32_10 : i32
    %34 = arith.index_cast %33 : i32 to index
    %35 = memref.load %arg2[%34] : memref<6xf32, #tpu.memory_space<smem>>
    %c6_i32_11 = arith.constant 6 : i32
    %36 = arith.muli %arg0, %c6_i32_11 : i32
    %c3_i32_12 = arith.constant 3 : i32
    %37 = arith.addi %36, %c3_i32_12 : i32
    %38 = arith.index_cast %37 : i32 to index
    %39 = memref.load %arg2[%38] : memref<6xf32, #tpu.memory_space<smem>>
    %c6_i32_13 = arith.constant 6 : i32
    %40 = arith.muli %arg0, %c6_i32_13 : i32
    %c4_i32_14 = arith.constant 4 : i32
    %41 = arith.addi %40, %c4_i32_14 : i32
    %42 = arith.index_cast %41 : i32 to index
    %43 = memref.load %arg2[%42] : memref<6xf32, #tpu.memory_space<smem>>
    %c6_i32_15 = arith.constant 6 : i32
    %44 = arith.muli %arg0, %c6_i32_15 : i32
    %c5_i32_16 = arith.constant 5 : i32
    %45 = arith.addi %44, %c5_i32_16 : i32
    %46 = arith.index_cast %45 : i32 to index
    %47 = memref.load %arg2[%46] : memref<6xf32, #tpu.memory_space<smem>>
    %c0 = arith.constant 0 : index
    %c0_17 = arith.constant 0 : index
    %48 = vector.load %arg4[%c0, %c0_17] : memref<8x16xbf16, #tpu.memory_space<vmem>>, vector<8x16xbf16>
    %c0_18 = arith.constant 0 : index
    %c0_19 = arith.constant 0 : index
    %49 = vector.load %arg5[%c0_18, %c0_19] : memref<24x128xbf16, #tpu.memory_space<vmem>>, vector<24x128xbf16>
    %c0_20 = arith.constant 0 : index
    %c0_21 = arith.constant 0 : index
    %c0_22 = arith.constant 0 : index
    %50 = vector.load %arg3[%c0_20, %c0_21, %c0_22] : memref<6x16x24xbf16, #tpu.memory_space<vmem>>, vector<6x16x24xbf16>
    %51 = vector.shape_cast %50 : vector<6x16x24xbf16> to vector<96x24xbf16>
    %cst = arith.constant dense<0.000000e+00> : vector<96x128xf32>
    %52 = tpu.matmul %51, %49, %cst {dimension_numbers = #tpu.dot_dimension_numbers<[1], [0], [0], [1], [0, 0, 1, 1], [], []>} : vector<96x24xbf16>, vector<24x128xbf16>, vector<96x128xf32> -> vector<96x128xf32>
    %53 = arith.truncf %52 : vector<96x128xf32> to vector<96x128xbf16>
    %54 = vector.extract_strided_slice %53 {offsets = [0, 0], sizes = [16, 128], strides = [1, 1]} : vector<96x128xbf16> to vector<16x128xbf16>
    %cst_23 = arith.constant dense<0.000000e+00> : vector<8x128xf32>
    %55 = tpu.matmul %48, %54, %cst_23 {dimension_numbers = #tpu.dot_dimension_numbers<[1], [0], [0], [1], [0, 0, 1, 1], [], []>} : vector<8x16xbf16>, vector<16x128xbf16>, vector<8x128xf32> -> vector<8x128xf32>
    %56 = vector.broadcast %3 : f32 to vector<8x128xf32>
    %57 = arith.subf %55, %56 : vector<8x128xf32>
    %58 = vector.broadcast %27 : f32 to vector<8x128xf32>
    %59 = arith.mulf %57, %58 : vector<8x128xf32>
    %c0_24 = arith.constant 0 : index
    %c0_25 = arith.constant 0 : index
    %c0_26 = arith.constant 0 : index
    %60 = vector.load %arg6[%c0_24, %c0_25, %c0_26] : memref<6x8x128xf32, #tpu.memory_space<vmem>>, vector<1x8x128xf32>
    %61 = vector.shape_cast %60 : vector<1x8x128xf32> to vector<8x128xf32>
    %62 = vector.shape_cast %59 : vector<8x128xf32> to vector<1x8x128xf32>
    tpu.vector_store %arg6[%c0_24, %c0_25, %c0_26], %62 {strides = array<i32>} : memref<6x8x128xf32, #tpu.memory_space<vmem>>, vector<1x8x128xf32>,
    %63 = vector.extract_strided_slice %53 {offsets = [16, 0], sizes = [16, 128], strides = [1, 1]} : vector<96x128xbf16> to vector<16x128xbf16>
    %cst_27 = arith.constant dense<0.000000e+00> : vector<8x128xf32>
    %64 = tpu.matmul %48, %63, %cst_27 {dimension_numbers = #tpu.dot_dimension_numbers<[1], [0], [0], [1], [0, 0, 1, 1], [], []>} : vector<8x16xbf16>, vector<16x128xbf16>, vector<8x128xf32> -> vector<8x128xf32>
    %65 = vector.broadcast %7 : f32 to vector<8x128xf32>
    %66 = arith.subf %64, %65 : vector<8x128xf32>
    %67 = vector.broadcast %31 : f32 to vector<8x128xf32>
    %68 = arith.mulf %66, %67 : vector<8x128xf32>
    %c1 = arith.constant 1 : index
    %c0_28 = arith.constant 0 : index
    %c0_29 = arith.constant 0 : index
    %69 = vector.load %arg6[%c1, %c0_28, %c0_29] : memref<6x8x128xf32, #tpu.memory_space<vmem>>, vector<1x8x128xf32>
    %70 = vector.shape_cast %69 : vector<1x8x128xf32> to vector<8x128xf32>
    %71 = vector.shape_cast %68 : vector<8x128xf32> to vector<1x8x128xf32>
    tpu.vector_store %arg6[%c1, %c0_28, %c0_29], %71 {strides = array<i32>} : memref<6x8x128xf32, #tpu.memory_space<vmem>>, vector<1x8x128xf32>,
    %72 = vector.extract_strided_slice %53 {offsets = [32, 0], sizes = [16, 128], strides = [1, 1]} : vector<96x128xbf16> to vector<16x128xbf16>
    %cst_30 = arith.constant dense<0.000000e+00> : vector<8x128xf32>
    %73 = tpu.matmul %48, %72, %cst_30 {dimension_numbers = #tpu.dot_dimension_numbers<[1], [0], [0], [1], [0, 0, 1, 1], [], []>} : vector<8x16xbf16>, vector<16x128xbf16>, vector<8x128xf32> -> vector<8x128xf32>
    %74 = vector.broadcast %11 : f32 to vector<8x128xf32>
    %75 = arith.subf %73, %74 : vector<8x128xf32>
    %76 = vector.broadcast %35 : f32 to vector<8x128xf32>
    %77 = arith.mulf %75, %76 : vector<8x128xf32>
    %c2 = arith.constant 2 : index
    %c0_31 = arith.constant 0 : index
    %c0_32 = arith.constant 0 : index
    %78 = vector.load %arg6[%c2, %c0_31, %c0_32] : memref<6x8x128xf32, #tpu.memory_space<vmem>>, vector<1x8x128xf32>
    %79 = vector.shape_cast %78 : vector<1x8x128xf32> to vector<8x128xf32>
    %80 = vector.shape_cast %77 : vector<8x128xf32> to vector<1x8x128xf32>
    tpu.vector_store %arg6[%c2, %c0_31, %c0_32], %80 {strides = array<i32>} : memref<6x8x128xf32, #tpu.memory_space<vmem>>, vector<1x8x128xf32>,
    %81 = vector.extract_strided_slice %53 {offsets = [48, 0], sizes = [16, 128], strides = [1, 1]} : vector<96x128xbf16> to vector<16x128xbf16>
    %cst_33 = arith.constant dense<0.000000e+00> : vector<8x128xf32>
    %82 = tpu.matmul %48, %81, %cst_33 {dimension_numbers = #tpu.dot_dimension_numbers<[1], [0], [0], [1], [0, 0, 1, 1], [], []>} : vector<8x16xbf16>, vector<16x128xbf16>, vector<8x128xf32> -> vector<8x128xf32>
    %83 = vector.broadcast %15 : f32 to vector<8x128xf32>
    %84 = arith.subf %82, %83 : vector<8x128xf32>
    %85 = vector.broadcast %39 : f32 to vector<8x128xf32>
    %86 = arith.mulf %84, %85 : vector<8x128xf32>
    %c3 = arith.constant 3 : index
    %c0_34 = arith.constant 0 : index
    %c0_35 = arith.constant 0 : index
    %87 = vector.load %arg6[%c3, %c0_34, %c0_35] : memref<6x8x128xf32, #tpu.memory_space<vmem>>, vector<1x8x128xf32>
    %88 = vector.shape_cast %87 : vector<1x8x128xf32> to vector<8x128xf32>
    %89 = vector.shape_cast %86 : vector<8x128xf32> to vector<1x8x128xf32>
    tpu.vector_store %arg6[%c3, %c0_34, %c0_35], %89 {strides = array<i32>} : memref<6x8x128xf32, #tpu.memory_space<vmem>>, vector<1x8x128xf32>,
    %90 = vector.extract_strided_slice %53 {offsets = [64, 0], sizes = [16, 128], strides = [1, 1]} : vector<96x128xbf16> to vector<16x128xbf16>
    %cst_36 = arith.constant dense<0.000000e+00> : vector<8x128xf32>
    %91 = tpu.matmul %48, %90, %cst_36 {dimension_numbers = #tpu.dot_dimension_numbers<[1], [0], [0], [1], [0, 0, 1, 1], [], []>} : vector<8x16xbf16>, vector<16x128xbf16>, vector<8x128xf32> -> vector<8x128xf32>
    %92 = vector.broadcast %19 : f32 to vector<8x128xf32>
    %93 = arith.subf %91, %92 : vector<8x128xf32>
    %94 = vector.broadcast %43 : f32 to vector<8x128xf32>
    %95 = arith.mulf %93, %94 : vector<8x128xf32>
    %c4 = arith.constant 4 : index
    %c0_37 = arith.constant 0 : index
    %c0_38 = arith.constant 0 : index
    %96 = vector.load %arg6[%c4, %c0_37, %c0_38] : memref<6x8x128xf32, #tpu.memory_space<vmem>>, vector<1x8x128xf32>
    %97 = vector.shape_cast %96 : vector<1x8x128xf32> to vector<8x128xf32>
    %98 = vector.shape_cast %95 : vector<8x128xf32> to vector<1x8x128xf32>
    tpu.vector_store %arg6[%c4, %c0_37, %c0_38], %98 {strides = array<i32>} : memref<6x8x128xf32, #tpu.memory_space<vmem>>, vector<1x8x128xf32>,
    %99 = vector.extract_strided_slice %53 {offsets = [80, 0], sizes = [16, 128], strides = [1, 1]} : vector<96x128xbf16> to vector<16x128xbf16>
    %cst_39 = arith.constant dense<0.000000e+00> : vector<8x128xf32>
    %100 = tpu.matmul %48, %99, %cst_39 {dimension_numbers = #tpu.dot_dimension_numbers<[1], [0], [0], [1], [0, 0, 1, 1], [], []>} : vector<8x16xbf16>, vector<16x128xbf16>, vector<8x128xf32> -> vector<8x128xf32>
    %101 = vector.broadcast %23 : f32 to vector<8x128xf32>
    %102 = arith.subf %100, %101 : vector<8x128xf32>
    %103 = vector.broadcast %47 : f32 to vector<8x128xf32>
    %104 = arith.mulf %102, %103 : vector<8x128xf32>
    %c5 = arith.constant 5 : index
    %c0_40 = arith.constant 0 : index
    %c0_41 = arith.constant 0 : index
    %105 = vector.load %arg6[%c5, %c0_40, %c0_41] : memref<6x8x128xf32, #tpu.memory_space<vmem>>, vector<1x8x128xf32>
    %106 = vector.shape_cast %105 : vector<1x8x128xf32> to vector<8x128xf32>
    %107 = vector.shape_cast %104 : vector<8x128xf32> to vector<1x8x128xf32>
    tpu.vector_store %arg6[%c5, %c0_40, %c0_41], %107 {strides = array<i32>} : memref<6x8x128xf32, #tpu.memory_space<vmem>>, vector<1x8x128xf32>,
    return
  }
  func.func @transform_0(%arg0: i32, %arg1: memref<6xf32, #tpu.memory_space<smem>>, %arg2: memref<6xf32, #tpu.memory_space<smem>>) -> (i32, i32, i32) {
    %c0_i32 = arith.constant 0 : i32
    %c0_i32_0 = arith.constant 0 : i32
    %c0_i32_1 = arith.constant 0 : i32
    return %arg0, %c0_i32, %c0_i32_0 : i32, i32, i32
  }
  func.func @transform_1(%arg0: i32, %arg1: memref<6xf32, #tpu.memory_space<smem>>, %arg2: memref<6xf32, #tpu.memory_space<smem>>) -> (i32, i32) {
    %c0_i32 = arith.constant 0 : i32
    %c0_i32_0 = arith.constant 0 : i32
    %c0_i32_1 = arith.constant 0 : i32
    return %c0_i32, %c0_i32_0 : i32, i32
  }
  func.func @transform_2(%arg0: i32, %arg1: memref<6xf32, #tpu.memory_space<smem>>, %arg2: memref<6xf32, #tpu.memory_space<smem>>) -> (i32, i32) {
    %c0_i32 = arith.constant 0 : i32
    %c0_i32_0 = arith.constant 0 : i32
    %c0_i32_1 = arith.constant 0 : i32
    return %c0_i32, %c0_i32_0 : i32, i32
  }
  func.func @transform_3(%arg0: i32, %arg1: memref<6xf32, #tpu.memory_space<smem>>, %arg2: memref<6xf32, #tpu.memory_space<smem>>) -> (i32, i32, i32) {
    %c0_i32 = arith.constant 0 : i32
    %c0_i32_0 = arith.constant 0 : i32
    %c0_i32_1 = arith.constant 0 : i32
    return %arg0, %c0_i32, %c0_i32_0 : i32, i32, i32
  }
}

</mosaic_0001>

<llo_original>
// kernel: tpu_custom_call.1
$region0: #{tpu_custom_call.1}
  #allocation0 [shape = 'u32[]', space=smem, size = 0x4, offset = 0x4, fixed_abs, tag = 'smem constant byte address 0x4 - core index']
  #allocation1 [shape = 'u32[144,128]{1,0:T(1,128)}', space=vmem, size = 0x12000, scoped, tag = 'internal scratch']
  #allocation2 [shape = 's32[1]{0}', space=sflag, size = 0x4, scoped, tag = 'scoped memory for tpu_custom_call.1']
  #allocation3 [shape = 'u8[512]{0}', space=smem, size = 0x200, scoped, tag = 'prefetched SMEM operand 0']
  #allocation4 [shape = 'u8[512]{0}', space=smem, size = 0x200, scoped, tag = 'prefetched SMEM operand 1']
  %s0 = inlined_call_operand.hbm [shape: f32[6], index: 0, kind: input, shape index: {}]
  %s1 = inlined_call_operand.vmem [shape: f32[6], index: 1, kind: input, shape index: {}]
  %s2 = inlined_call_operand.hbm [shape: bf16[6,16,24], index: 2, kind: input, shape index: {}]
  %s3 = inlined_call_operand.hbm [shape: bf16[8,16], index: 3, kind: input, shape index: {}]
  %s4 = inlined_call_operand.vmem [shape: bf16[24,128], index: 4, kind: input, shape index: {}]
  %s5 = inlined_call_operand.hbm [shape: f32[6,8,128], index: 5, kind: output, shape index: {}]
  %s6 = sld [smem:[#allocation0]]
  $region30: #{tpu_custom_call.1} parent=0
    _
  %s8 = ssub.s32 1, %s6
  %s9 = scalar_select 0, %s8, %s6
  %11 = dma.hbm_to_smem %s0, 16, [#allocation3], [#allocation2]
  %s12 = sshll.u32 %s1, 4
  %s13 = int_to_ptr.vmem [resolvable:$true] %s12
  %15 = dma.vmem_to_smem %s13, 16, [#allocation4], [#allocation2]
  %16 = dma.done [#allocation2], 32
  %17 = sfence
  $region1: #{tpu_custom_call.1} parent=0
    #allocation5 [shape = 'u8[24576]{0}', space=vmem, size = 0x6000, scoped, tag = 'input window, operand 2, single buffered']
    #allocation6 [shape = 's32[1]{0}', space=sflag, size = 0x4, scoped, tag = 'scoped memory for tpu_custom_call.1']
    #allocation7 [shape = 's32[1]{0}', space=sflag, size = 0x4, scoped, tag = 'scoped memory for tpu_custom_call.1']
    #allocation8 [shape = 'u8[2048]{0}', space=vmem, size = 0x800, scoped, tag = 'input window, operand 3, single buffered']
    #allocation9 [shape = 's32[1]{0}', space=sflag, size = 0x4, scoped, tag = 'scoped memory for tpu_custom_call.1']
    #allocation10 [shape = 'u8[24576]{0}', space=vmem, size = 0x6000, scoped, tag = 'output window, operand 0, single buffered']
    %18 = vsyncpa [#allocation6], 0
    %19 = vsyncpa [#allocation9], 0
    %20 = vsyncpa [#allocation7], 0
    // Predicated region
    $region2: #{tpu_custom_call.1} parent=1 // pred_check
      _
    $region3: #{tpu_custom_call.1} parent=1 // pred_check_branch
      %22 = sbr.rel (0) target = $region5
    $region4: #{tpu_custom_call.1} parent=1 // pred_region
      %s24 = ssub.s32 768, 768
      %25 = vsyncadd [#allocation6], %s24
      %s26 = sshll.u32 [#allocation5], 4
      %s27 = int_to_ptr.vmem [resolvable:$true] %s26
      %32 = dma.hbm_to_vmem [thread:$0]  %s2, 768, %s27, [#allocation6], 64, 64, 4
    $region5: #{tpu_custom_call.1} parent=1 // pred_fallthru
      _
    // Predicated region
    $region6: #{tpu_custom_call.1} parent=1 // pred_check
      _
    $region7: #{tpu_custom_call.1} parent=1 // pred_check_branch
      %34 = sbr.rel (0) target = $region9
    $region8: #{tpu_custom_call.1} parent=1 // pred_region
      %s36 = ssub.s32 64, 64
      %37 = vsyncadd [#allocation9], %s36
      %s39 = sshll.u32 [#allocation8], 4
      %s40 = int_to_ptr.vmem [resolvable:$true] %s39
      %42 = dma.hbm_to_vmem [thread:$0]  %s3, 64, %s40, [#allocation9]
    $region9: #{tpu_custom_call.1} parent=1 // pred_fallthru
      _
    // Predicated region
    $region10: #{tpu_custom_call.1} parent=1 // pred_check
      _
    $region11: #{tpu_custom_call.1} parent=1 // pred_check_branch
      %44 = sbr.rel (0) target = $region13
    $region12: #{tpu_custom_call.1} parent=1 // pred_region
      _
    $region13: #{tpu_custom_call.1} parent=1 // pred_fallthru
      _
    // Predicated region
    $region14: #{tpu_custom_call.1} parent=1 // pred_check
      _
    $region15: #{tpu_custom_call.1} parent=1 // pred_check_branch
      %46 = sbr.rel (0) target = $region17
    $region16: #{tpu_custom_call.1} parent=1 // pred_region
      %47 = dma.done [#allocation6], 768
    $region17: #{tpu_custom_call.1} parent=1 // pred_fallthru
      _
    // Predicated region
    $region18: #{tpu_custom_call.1} parent=1 // pred_check
      _
    $region19: #{tpu_custom_call.1} parent=1 // pred_check_branch
      %49 = sbr.rel (0) target = $region21
    $region20: #{tpu_custom_call.1} parent=1 // pred_region
      %50 = dma.done [#allocation9], 64
    $region21: #{tpu_custom_call.1} parent=1 // pred_fallthru
      _
    %s52 = smul.u32 0, 6
    %s53 = sld [smem:[#allocation3 + %s52]]
    %s54 = sadd.s32 %s52, 1
    %s55 = sld [smem:[#allocation3 + %s54]]
    %s56 = sadd.s32 %s52, 2
    %s57 = sld [smem:[#allocation3 + %s56]]
    %s58 = sadd.s32 %s52, 3
    %s59 = sld [smem:[#allocation3 + %s58]]
    %s60 = sadd.s32 %s52, 4
    %s61 = sld [smem:[#allocation3 + %s60]]
    %s62 = sadd.s32 %s52, 5
    %s63 = sld [smem:[#allocation3 + %s62]]
    %s64 = sld [smem:[#allocation4 + %s52]]
    %s65 = sld [smem:[#allocation4 + %s54]]
    %s66 = sld [smem:[#allocation4 + %s56]]
    %s67 = sld [smem:[#allocation4 + %s58]]
    %s68 = sld [smem:[#allocation4 + %s60]]
    %s69 = sld [smem:[#allocation4 + %s62]]
    %v70 = vld [vmem:[#allocation8] sm:$0xf]
    %v71 = vld [vmem:[%s4] sm:$0xf]
    %v72 = vld [vmem:[%s4 + $0x4] sm:$0xf]
    %v73 = vld [vmem:[%s4 + $0x8] sm:$0xf]
    %v74 = vld [vmem:[#allocation5] sm:$0xf]
    %v75 = vld [vmem:[#allocation5 + $0x4] sm:$0xf]
    %v76 = vld [vmem:[#allocation5 + $0x8] sm:$0xf]
    %v77 = vld [vmem:[#allocation5 + $0xc] sm:$0xf]
    %v78 = vld [vmem:[#allocation5 + $0x10] sm:$0xf]
    %v79 = vld [vmem:[#allocation5 + $0x14] sm:$0xf]
    %v80 = vld [vmem:[#allocation5 + $0x18] sm:$0xf]
    %v81 = vld [vmem:[#allocation5 + $0x1c] sm:$0xf]
    %v82 = vld [vmem:[#allocation5 + $0x20] sm:$0xf]
    %v83 = vld [vmem:[#allocation5 + $0x24] sm:$0xf]
    %v84 = vld [vmem:[#allocation5 + $0x28] sm:$0xf]
    %v85 = vld [vmem:[#allocation5 + $0x2c] sm:$0xf]
    %v98 = vunpack.c.l.b16 %v74
    %v99 = vunpack.c.l.b16 %v75
    %v100 = vunpack.c.l.b16 %v76
    %v101 = vunpack.c.l.b16 %v77
    %v102 = vunpack.c.l.b16 %v78
    %v103 = vunpack.c.l.b16 %v79
    %v104 = vunpack.c.l.b16 %v80
    %v105 = vunpack.c.l.b16 %v81
    %v106 = vunpack.c.l.b16 %v82
    %v107 = vunpack.c.l.b16 %v83
    %v108 = vunpack.c.l.b16 %v84
    %v109 = vunpack.c.l.b16 %v85
    %v110 = vpack.c.b16 %v99, %v98
    %v111 = vpack.c.b16 %v101, %v100
    %v112 = vpack.c.b16 %v103, %v102
    %v113 = vpack.c.b16 %v105, %v104
    %v114 = vpack.c.b16 %v107, %v106
    %v115 = vpack.c.b16 %v109, %v108
    %v119 = vunpack.c.l.b16 %v71
    %v120 = vunpack.c.l.b16 %v72
    %v121 = vunpack.c.l.b16 %v73
    %v122 = vpack.c.b16 %v120, %v119
    %v123 = vpack.c.b16 %v121, %v121
    %vm125 = vcmask 195584
    %v127 = vsel %vm125, %v110, 0
    %v130 = vsel %vm125, %v111, 0
    %v133 = vsel %vm125, %v112, 0
    %v136 = vsel %vm125, %v113, 0
    %v139 = vsel %vm125, %v114, 0
    %v142 = vsel %vm125, %v115, 0
    %vm144 = vcmask 1043456
    %v146 = vsel %vm144, %v123, 0
    %148 = vmatprep.subr.bf16.mxu0 0
    %149 = vmatpush1.bf16.msra.mxu0 %v122
    %150 = vmatprep.subr.bf16.mxu0 0
    %151 = vmatpush1.bf16.msra.mxu0 %v146
    %152 = vmatprep.subr.bf16.mxu0 0
    %153 = vmatpush1.bf16.msra.mxu0 0
    %154 = vmatprep.subr.bf16.mxu0 0
    %155 = vmatpush1.bf16.msra.mxu0 0
    %156 = vmatprep.subr.bf16.mxu0 0
    %157 = vmatpush1.bf16.msra.mxu0 0
    %158 = vmatprep.subr.bf16.mxu0 0
    %159 = vmatpush1.bf16.msra.mxu0 0
    %160 = vmatprep.subr.bf16.mxu0 0
    %161 = vmatpush1.bf16.msra.mxu0 0
    %162 = vmatprep.subr.bf16.mxu0 0
    %163 = vmatpush1.bf16.msra.mxu0 0
    %164 = vmatprep.subr.bf16.mxu0 0
    %165 = vmatpush1.bf16.msra.mxu0 0
    %166 = vmatprep.subr.bf16.mxu0 0
    %167 = vmatpush1.bf16.msra.mxu0 0
    %168 = vmatprep.subr.bf16.mxu0 0
    %169 = vmatpush1.bf16.msra.mxu0 0
    %170 = vmatprep.subr.bf16.mxu0 0
    %171 = vmatpush1.bf16.msra.mxu0 0
    %172 = vmatprep.subr.bf16.mxu0 0
    %173 = vmatpush1.bf16.msra.mxu0 0
    %174 = vmatprep.subr.bf16.mxu0 0
    %175 = vmatpush1.bf16.msra.mxu0 0
    %176 = vmatprep.subr.bf16.mxu0 0
    %177 = vmatpush1.bf16.msra.mxu0 0
    %178 = vmatprep.subr.bf16.mxu0 0
    %179 = vmatpush1.bf16.msra.mxu0 0
    %180 = vmatprep.mubr.bf16.mxu0 0
    %181 = vmatmul.mubr.bf16.gmra.mrb[0].mxu0 %v127
    %v182 = vpop.f32.mrb[0].mxu0
    %v183 = vadd.f32 0.0, %v182
    %v184 = vpop.f32.mrb[0].mxu0
    %v185 = vpop.f32.mrb[0].mxu0
    %v186 = vadd.f32 0.0, %v185
    %v187 = vpop.f32.mrb[0].mxu0
    %188 = vmatprep.mubr.bf16.mxu0 0
    %189 = vmatmul.mubr.bf16.gmra.mrb[0].mxu0 %v130
    %v190 = vpop.f32.mrb[0].mxu0
    %v191 = vadd.f32 0.0, %v190
    %v192 = vpop.f32.mrb[0].mxu0
    %v193 = vpop.f32.mrb[0].mxu0
    %v194 = vadd.f32 0.0, %v193
    %v195 = vpop.f32.mrb[0].mxu0
    %196 = vmatprep.mubr.bf16.mxu0 0
    %197 = vmatmul.mubr.bf16.gmra.mrb[0].mxu0 %v133
    %v198 = vpop.f32.mrb[0].mxu0
    %v199 = vadd.f32 0.0, %v198
    %v200 = vpop.f32.mrb[0].mxu0
    %v201 = vpop.f32.mrb[0].mxu0
    %v202 = vadd.f32 0.0, %v201
    %v203 = vpop.f32.mrb[0].mxu0
    %204 = vmatprep.mubr.bf16.mxu0 0
    %205 = vmatmul.mubr.bf16.gmra.mrb[0].mxu0 %v136
    %v206 = vpop.f32.mrb[0].mxu0
    %v207 = vadd.f32 0.0, %v206
    %v208 = vpop.f32.mrb[0].mxu0
    %v209 = vpop.f32.mrb[0].mxu0
    %v210 = vadd.f32 0.0, %v209
    %v211 = vpop.f32.mrb[0].mxu0
    %212 = vmatprep.mubr.bf16.mxu0 0
    %213 = vmatmul.mubr.bf16.gmra.mrb[0].mxu0 %v139
    %v214 = vpop.f32.mrb[0].mxu0
    %v215 = vadd.f32 0.0, %v214
    %v216 = vpop.f32.mrb[0].mxu0
    %v217 = vpop.f32.mrb[0].mxu0
    %v218 = vadd.f32 0.0, %v217
    %v219 = vpop.f32.mrb[0].mxu0
    %220 = vmatprep.mubr.bf16.mxu0 0
    %221 = vmatmul.mubr.bf16.gmra.mrb[0].mxu0 %v142
    %v222 = vpop.f32.mrb[0].mxu0
    %v223 = vadd.f32 0.0, %v222
    %v224 = vpop.f32.mrb[0].mxu0
    %v225 = vpop.f32.mrb[0].mxu0
    %v226 = vadd.f32 0.0, %v225
    %v227 = vpop.f32.mrb[0].mxu0
    %228 = vdwg.mxu0
    %v229 = vpack.c.bf16 %v186, %v183
    %v230 = vpack.c.bf16 %v194, %v191
    %v231 = vpack.c.bf16 %v202, %v199
    %v232 = vpack.c.bf16 %v210, %v207
    %v233 = vpack.c.bf16 %v218, %v215
    %v234 = vpack.c.bf16 %v226, %v223
    %vm235 = vcmask 130048
    %v237 = vsel %vm235, %v70, 0
    %239 = vmatprep.subr.bf16.mxu0 0
    %240 = vmatpush1.bf16.msra.mxu0 %v229
    %241 = vmatprep.subr.bf16.mxu0 0
    %242 = vmatpush1.bf16.msra.mxu0 0
    %243 = vmatprep.subr.bf16.mxu0 0
    %244 = vmatpush1.bf16.msra.mxu0 0
    %245 = vmatprep.subr.bf16.mxu0 0
    %246 = vmatpush1.bf16.msra.mxu0 0
    %247 = vmatprep.subr.bf16.mxu0 0
    %248 = vmatpush1.bf16.msra.mxu0 0
    %249 = vmatprep.subr.bf16.mxu0 0
    %250 = vmatpush1.bf16.msra.mxu0 0
    %251 = vmatprep.subr.bf16.mxu0 0
    %252 = vmatpush1.bf16.msra.mxu0 0
    %253 = vmatprep.subr.bf16.mxu0 0
    %254 = vmatpush1.bf16.msra.mxu0 0
    %255 = vmatprep.subr.bf16.mxu0 0
    %256 = vmatpush1.bf16.msra.mxu0 0
    %257 = vmatprep.subr.bf16.mxu0 0
    %258 = vmatpush1.bf16.msra.mxu0 0
    %259 = vmatprep.subr.bf16.mxu0 0
    %260 = vmatpush1.bf16.msra.mxu0 0
    %261 = vmatprep.subr.bf16.mxu0 0
    %262 = vmatpush1.bf16.msra.mxu0 0
    %263 = vmatprep.subr.bf16.mxu0 0
    %264 = vmatpush1.bf16.msra.mxu0 0
    %265 = vmatprep.subr.bf16.mxu0 0
    %266 = vmatpush1.bf16.msra.mxu0 0
    %267 = vmatprep.subr.bf16.mxu0 0
    %268 = vmatpush1.bf16.msra.mxu0 0
    %269 = vmatprep.subr.bf16.mxu0 0
    %270 = vmatpush1.bf16.msra.mxu0 0
    %271 = vmatprep.mubr.bf16.mxu0 0
    %272 = vmatmul.mubr.bf16.gmra.mrb[0].mxu0 %v237
    %v273 = vpop.f32.mrb[0].mxu0
    %v274 = vadd.f32 0.0, %v273
    %v275 = vpop.f32.mrb[0].mxu0
    %v276 = vpop.f32.mrb[0].mxu0
    %v277 = vpop.f32.mrb[0].mxu0
    %278 = vdwg.mxu0
    %v279 = vstv %s53
    %v280 = vsub.f32 %v274, %v279
    %v281 = vstv %s64
    %v282 = vmul.f32 %v280, %v281
    %283 = vst [vmem:[#allocation10] sm:$0xff] %v282
    %284 = vmatprep.subr.bf16.mxu0 0
    %285 = vmatpush1.bf16.msra.mxu0 %v230
    %286 = vmatprep.subr.bf16.mxu0 0
    %287 = vmatpush1.bf16.msra.mxu0 0
    %288 = vmatprep.subr.bf16.mxu0 0
    %289 = vmatpush1.bf16.msra.mxu0 0
    %290 = vmatprep.subr.bf16.mxu0 0
    %291 = vmatpush1.bf16.msra.mxu0 0
    %292 = vmatprep.subr.bf16.mxu0 0
    %293 = vmatpush1.bf16.msra.mxu0 0
    %294 = vmatprep.subr.bf16.mxu0 0
    %295 = vmatpush1.bf16.msra.mxu0 0
    %296 = vmatprep.subr.bf16.mxu0 0
    %297 = vmatpush1.bf16.msra.mxu0 0
    %298 = vmatprep.subr.bf16.mxu0 0
    %299 = vmatpush1.bf16.msra.mxu0 0
    %300 = vmatprep.subr.bf16.mxu0 0
    %301 = vmatpush1.bf16.msra.mxu0 0
    %302 = vmatprep.subr.bf16.mxu0 0
    %303 = vmatpush1.bf16.msra.mxu0 0
    %304 = vmatprep.subr.bf16.mxu0 0
    %305 = vmatpush1.bf16.msra.mxu0 0
    %306 = vmatprep.subr.bf16.mxu0 0
    %307 = vmatpush1.bf16.msra.mxu0 0
    %308 = vmatprep.subr.bf16.mxu0 0
    %309 = vmatpush1.bf16.msra.mxu0 0
    %310 = vmatprep.subr.bf16.mxu0 0
    %311 = vmatpush1.bf16.msra.mxu0 0
    %312 = vmatprep.subr.bf16.mxu0 0
    %313 = vmatpush1.bf16.msra.mxu0 0
    %314 = vmatprep.subr.bf16.mxu0 0
    %315 = vmatpush1.bf16.msra.mxu0 0
    %316 = vmatprep.mubr.bf16.mxu0 0
    %317 = vmatmul.mubr.bf16.gmra.mrb[0].mxu0 %v237
    %v318 = vpop.f32.mrb[0].mxu0
    %v319 = vadd.f32 0.0, %v318
    %v320 = vpop.f32.mrb[0].mxu0
    %v321 = vpop.f32.mrb[0].mxu0
    %v322 = vpop.f32.mrb[0].mxu0
    %323 = vdwg.mxu0
    %v324 = vstv %s55
    %v325 = vsub.f32 %v319, %v324
    %v326 = vstv %s65
    %v327 = vmul.f32 %v325, %v326
    %s328 = scalar_lea.vmem [#allocation10], 8
    %329 = vst [vmem:[%s328] sm:$0xff] %v327
    %330 = vmatprep.subr.bf16.mxu0 0
    %331 = vmatpush1.bf16.msra.mxu0 %v231
    %332 = vmatprep.subr.bf16.mxu0 0
    %333 = vmatpush1.bf16.msra.mxu0 0
    %334 = vmatprep.subr.bf16.mxu0 0
    %335 = vmatpush1.bf16.msra.mxu0 0
    %336 = vmatprep.subr.bf16.mxu0 0
    %337 = vmatpush1.bf16.msra.mxu0 0
    %338 = vmatprep.subr.bf16.mxu0 0
    %339 = vmatpush1.bf16.msra.mxu0 0
    %340 = vmatprep.subr.bf16.mxu0 0
    %341 = vmatpush1.bf16.msra.mxu0 0
    %342 = vmatprep.subr.bf16.mxu0 0
    %343 = vmatpush1.bf16.msra.mxu0 0
    %344 = vmatprep.subr.bf16.mxu0 0
    %345 = vmatpush1.bf16.msra.mxu0 0
    %346 = vmatprep.subr.bf16.mxu0 0
    %347 = vmatpush1.bf16.msra.mxu0 0
    %348 = vmatprep.subr.bf16.mxu0 0
    %349 = vmatpush1.bf16.msra.mxu0 0
    %350 = vmatprep.subr.bf16.mxu0 0
    %351 = vmatpush1.bf16.msra.mxu0 0
    %352 = vmatprep.subr.bf16.mxu0 0
    %353 = vmatpush1.bf16.msra.mxu0 0
    %354 = vmatprep.subr.bf16.mxu0 0
    %355 = vmatpush1.bf16.msra.mxu0 0
    %356 = vmatprep.subr.bf16.mxu0 0
    %357 = vmatpush1.bf16.msra.mxu0 0
    %358 = vmatprep.subr.bf16.mxu0 0
    %359 = vmatpush1.bf16.msra.mxu0 0
    %360 = vmatprep.subr.bf16.mxu0 0
    %361 = vmatpush1.bf16.msra.mxu0 0
    %362 = vmatprep.mubr.bf16.mxu0 0
    %363 = vmatmul.mubr.bf16.gmra.mrb[0].mxu0 %v237
    %v364 = vpop.f32.mrb[0].mxu0
    %v365 = vadd.f32 0.0, %v364
    %v366 = vpop.f32.mrb[0].mxu0
    %v367 = vpop.f32.mrb[0].mxu0
    %v368 = vpop.f32.mrb[0].mxu0
    %369 = vdwg.mxu0
    %v370 = vstv %s57
    %v371 = vsub.f32 %v365, %v370
    %v372 = vstv %s66
    %v373 = vmul.f32 %v371, %v372
    %s374 = scalar_lea.vmem [#allocation10], 16
    %375 = vst [vmem:[%s374] sm:$0xff] %v373
    %376 = vmatprep.subr.bf16.mxu0 0
    %377 = vmatpush1.bf16.msra.mxu0 %v232
    %378 = vmatprep.subr.bf16.mxu0 0
    %379 = vmatpush1.bf16.msra.mxu0 0
    %380 = vmatprep.subr.bf16.mxu0 0
    %381 = vmatpush1.bf16.msra.mxu0 0
    %382 = vmatprep.subr.bf16.mxu0 0
    %383 = vmatpush1.bf16.msra.mxu0 0
    %384 = vmatprep.subr.bf16.mxu0 0
    %385 = vmatpush1.bf16.msra.mxu0 0
    %386 = vmatprep.subr.bf16.mxu0 0
    %387 = vmatpush1.bf16.msra.mxu0 0
    %388 = vmatprep.subr.bf16.mxu0 0
    %389 = vmatpush1.bf16.msra.mxu0 0
    %390 = vmatprep.subr.bf16.mxu0 0
    %391 = vmatpush1.bf16.msra.mxu0 0
    %392 = vmatprep.subr.bf16.mxu0 0
    %393 = vmatpush1.bf16.msra.mxu0 0
    %394 = vmatprep.subr.bf16.mxu0 0
    %395 = vmatpush1.bf16.msra.mxu0 0
    %396 = vmatprep.subr.bf16.mxu0 0
    %397 = vmatpush1.bf16.msra.mxu0 0
    %398 = vmatprep.subr.bf16.mxu0 0
    %399 = vmatpush1.bf16.msra.mxu0 0
    %400 = vmatprep.subr.bf16.mxu0 0
    %401 = vmatpush1.bf16.msra.mxu0 0
    %402 = vmatprep.subr.bf16.mxu0 0
    %403 = vmatpush1.bf16.msra.mxu0 0
    %404 = vmatprep.subr.bf16.mxu0 0
    %405 = vmatpush1.bf16.msra.mxu0 0
    %406 = vmatprep.subr.bf16.mxu0 0
    %407 = vmatpush1.bf16.msra.mxu0 0
    %408 = vmatprep.mubr.bf16.mxu0 0
    %409 = vmatmul.mubr.bf16.gmra.mrb[0].mxu0 %v237
    %v410 = vpop.f32.mrb[0].mxu0
    %v411 = vadd.f32 0.0, %v410
    %v412 = vpop.f32.mrb[0].mxu0
    %v413 = vpop.f32.mrb[0].mxu0
    %v414 = vpop.f32.mrb[0].mxu0
    %415 = vdwg.mxu0
    %v416 = vstv %s59
    %v417 = vsub.f32 %v411, %v416
    %v418 = vstv %s67
    %v419 = vmul.f32 %v417, %v418
    %s420 = scalar_lea.vmem [#allocation10], 24
    %421 = vst [vmem:[%s420] sm:$0xff] %v419
    %422 = vmatprep.subr.bf16.mxu0 0
    %423 = vmatpush1.bf16.msra.mxu0 %v233
    %424 = vmatprep.subr.bf16.mxu0 0
    %425 = vmatpush1.bf16.msra.mxu0 0
    %426 = vmatprep.subr.bf16.mxu0 0
    %427 = vmatpush1.bf16.msra.mxu0 0
    %428 = vmatprep.subr.bf16.mxu0 0
    %429 = vmatpush1.bf16.msra.mxu0 0
    %430 = vmatprep.subr.bf16.mxu0 0
    %431 = vmatpush1.bf16.msra.mxu0 0
    %432 = vmatprep.subr.bf16.mxu0 0
    %433 = vmatpush1.bf16.msra.mxu0 0
    %434 = vmatprep.subr.bf16.mxu0 0
    %435 = vmatpush1.bf16.msra.mxu0 0
    %436 = vmatprep.subr.bf16.mxu0 0
    %437 = vmatpush1.bf16.msra.mxu0 0
    %438 = vmatprep.subr.bf16.mxu0 0
    %439 = vmatpush1.bf16.msra.mxu0 0
    %440 = vmatprep.subr.bf16.mxu0 0
    %441 = vmatpush1.bf16.msra.mxu0 0
    %442 = vmatprep.subr.bf16.mxu0 0
    %443 = vmatpush1.bf16.msra.mxu0 0
    %444 = vmatprep.subr.bf16.mxu0 0
    %445 = vmatpush1.bf16.msra.mxu0 0
    %446 = vmatprep.subr.bf16.mxu0 0
    %447 = vmatpush1.bf16.msra.mxu0 0
    %448 = vmatprep.subr.bf16.mxu0 0
    %449 = vmatpush1.bf16.msra.mxu0 0
    %450 = vmatprep.subr.bf16.mxu0 0
    %451 = vmatpush1.bf16.msra.mxu0 0
    %452 = vmatprep.subr.bf16.mxu0 0
    %453 = vmatpush1.bf16.msra.mxu0 0
    %454 = vmatprep.mubr.bf16.mxu0 0
    %455 = vmatmul.mubr.bf16.gmra.mrb[0].mxu0 %v237
    %v456 = vpop.f32.mrb[0].mxu0
    %v457 = vadd.f32 0.0, %v456
    %v458 = vpop.f32.mrb[0].mxu0
    %v459 = vpop.f32.mrb[0].mxu0
    %v460 = vpop.f32.mrb[0].mxu0
    %461 = vdwg.mxu0
    %v462 = vstv %s61
    %v463 = vsub.f32 %v457, %v462
    %v464 = vstv %s68
    %v465 = vmul.f32 %v463, %v464
    %s466 = scalar_lea.vmem [#allocation10], 32
    %467 = vst [vmem:[%s466] sm:$0xff] %v465
    %468 = vmatprep.subr.bf16.mxu0 0
    %469 = vmatpush1.bf16.msra.mxu0 %v234
    %470 = vmatprep.subr.bf16.mxu0 0
    %471 = vmatpush1.bf16.msra.mxu0 0
    %472 = vmatprep.subr.bf16.mxu0 0
    %473 = vmatpush1.bf16.msra.mxu0 0
    %474 = vmatprep.subr.bf16.mxu0 0
    %475 = vmatpush1.bf16.msra.mxu0 0
    %476 = vmatprep.subr.bf16.mxu0 0
    %477 = vmatpush1.bf16.msra.mxu0 0
    %478 = vmatprep.subr.bf16.mxu0 0
    %479 = vmatpush1.bf16.msra.mxu0 0
    %480 = vmatprep.subr.bf16.mxu0 0
    %481 = vmatpush1.bf16.msra.mxu0 0
    %482 = vmatprep.subr.bf16.mxu0 0
    %483 = vmatpush1.bf16.msra.mxu0 0
    %484 = vmatprep.subr.bf16.mxu0 0
    %485 = vmatpush1.bf16.msra.mxu0 0
    %486 = vmatprep.subr.bf16.mxu0 0
    %487 = vmatpush1.bf16.msra.mxu0 0
    %488 = vmatprep.subr.bf16.mxu0 0
    %489 = vmatpush1.bf16.msra.mxu0 0
    %490 = vmatprep.subr.bf16.mxu0 0
    %491 = vmatpush1.bf16.msra.mxu0 0
    %492 = vmatprep.subr.bf16.mxu0 0
    %493 = vmatpush1.bf16.msra.mxu0 0
    %494 = vmatprep.subr.bf16.mxu0 0
    %495 = vmatpush1.bf16.msra.mxu0 0
    %496 = vmatprep.subr.bf16.mxu0 0
    %497 = vmatpush1.bf16.msra.mxu0 0
    %498 = vmatprep.subr.bf16.mxu0 0
    %499 = vmatpush1.bf16.msra.mxu0 0
    %500 = vmatprep.mubr.bf16.mxu0 0
    %501 = vmatmul.mubr.bf16.gmra.mrb[0].mxu0 %v237
    %v502 = vpop.f32.mrb[0].mxu0
    %v503 = vadd.f32 0.0, %v502
    %v504 = vpop.f32.mrb[0].mxu0
    %v505 = vpop.f32.mrb[0].mxu0
    %v506 = vpop.f32.mrb[0].mxu0
    %507 = vdwg.mxu0
    %v508 = vstv %s63
    %v509 = vsub.f32 %v503, %v508
    %v510 = vstv %s69
    %v511 = vmul.f32 %v509, %v510
    %s512 = scalar_lea.vmem [#allocation10], 40
    %513 = vst [vmem:[%s512] sm:$0xff] %v511
    // Predicated region
    $region22: #{tpu_custom_call.1} parent=1 // pred_check
      _
    $region23: #{tpu_custom_call.1} parent=1 // pred_check_branch
      %515 = sbr.rel (0) target = $region25
    $region24: #{tpu_custom_call.1} parent=1 // pred_region
      %s517 = ssub.s32 768, 768
      %518 = vsyncadd [#allocation7], %s517
      %s519 = sshll.u32 [#allocation10], 4
      %s520 = int_to_ptr.vmem [resolvable:$true] %s519
      %525 = dma.vmem_to_hbm [thread:$0]  %s520, 768, %s5, [#allocation7], 128, 128, 8
    $region25: #{tpu_custom_call.1} parent=1 // pred_fallthru
      _
    // Predicated region
    $region26: #{tpu_custom_call.1} parent=1 // pred_check
      _
    $region27: #{tpu_custom_call.1} parent=1 // pred_check_branch
      %527 = sbr.rel (0) target = $region29
    $region28: #{tpu_custom_call.1} parent=1 // pred_region
      %528 = dma.done [#allocation7], 768
    $region29: #{tpu_custom_call.1} parent=1 // pred_fallthru
      _
    %529 = vsyncpa [#allocation6], 1
    %530 = vsyncpa [#allocation9], 1
    %531 = vsyncpa [#allocation7], 1

</llo_original>
